<compile_context>
chip_gen: v5e
topology: v5e:2x2
jax: 0.10.0
libtpu: 0.0.40
codegen_flags: <defaults>
</compile_context>

<pallas_src>
import functools

import jax
import jax.numpy as jnp
from jax.experimental import pallas as pl
from jax.experimental.pallas import tpu as pltpu

_LANE = 128
_SUBLANE = 8


def _round_up(n, m):
    return ((n + m - 1) // m) * m


def _silu(v):
    return v * jax.nn.sigmoid(v)


def context_kernel(x_ref,
                   wpos_ref, bpos_ref,
                   wneg_ref, bneg_ref,
                   wpre_t_ref, wpre_b_ref, bpre_ref,
                   wdiff_ref, bdiff_ref,
                   ctx_ref, prob_ref):
    x = x_ref[...]                                                  # bf16 (TB, Dp)

    # Context_newtork: two Linear + SiLU branches (bf16 MXU, f32 accumulate).
    pos = _silu(jnp.dot(x, wpos_ref[...],
                        preferred_element_type=jnp.float32) + bpos_ref[...])
    neg = _silu(jnp.dot(x, wneg_ref[...],
                        preferred_element_type=jnp.float32) + bneg_ref[...])

    # Probability_network.pre_prob on cat(pos, neg):
    #   cat(pos, neg) @ [[Wt],[Wb]] == pos @ Wt + neg @ Wb   (exact rewrite).
    z = _silu(jnp.dot(pos.astype(jnp.bfloat16), wpre_t_ref[...],
                      preferred_element_type=jnp.float32)
              + jnp.dot(neg.astype(jnp.bfloat16), wpre_b_ref[...],
                        preferred_element_type=jnp.float32)
              + bpre_ref[...])                                      # (TB, Hp)

    # 2-class softmax == sigmoid of the logit difference; the (H,2) matmul is
    # folded into a VPU multiply + lane reduce against w_diff = w0 - w1.
    logit = (jnp.sum(z * wdiff_ref[...], axis=-1, keepdims=True)
             + bdiff_ref[0, 0])                                     # (TB, 1)
    p_pos = jax.nn.sigmoid(logit)
    p_neg = 1.0 - p_pos

    ctx_ref[...] = p_pos * pos + p_neg * neg                        # (TB, Hp)
    # Lane-dense prob output: broadcast across 128 lanes, sliced outside.
    prob_ref[...] = jnp.broadcast_to(p_pos, prob_ref.shape)


def _pad2(a, rows, cols, dtype):
    a = a.astype(dtype)
    return jnp.pad(a, ((0, rows - a.shape[0]), (0, cols - a.shape[1])))


@functools.partial(jax.jit, static_argnames=("block_b",))
def context_forward(x, params, *, block_b=256):
    """x: (B, input_dim) f32.  Returns (context (B,H) f32, prob_pos (B,) f32)."""
    B, D = x.shape
    H = params["w_pos"].shape[1]

    Dp = _round_up(D, _LANE)
    Hp = _round_up(H, _LANE)
    TB = min(block_b, _round_up(B, _SUBLANE))
    Bp = _round_up(B, TB)

    # Pad to lane-dense shapes; bf16 for MXU operands, f32 elsewhere.
    x_p = _pad2(x, Bp, Dp, jnp.bfloat16)
    w_pos = _pad2(params["w_pos"], Dp, Hp, jnp.bfloat16)
    w_neg = _pad2(params["w_neg"], Dp, Hp, jnp.bfloat16)
    b_pos = _pad2(params["b_pos"], 1, Hp, jnp.float32)
    b_neg = _pad2(params["b_neg"], 1, Hp, jnp.float32)
    w_pre_t = _pad2(params["w_pre"][:H, :], Hp, Hp, jnp.bfloat16)
    w_pre_b = _pad2(params["w_pre"][H:, :], Hp, Hp, jnp.bfloat16)
    b_pre = _pad2(params["b_pre"], 1, Hp, jnp.float32)
    w_diff = _pad2((params["w_prob"][:, 0] - params["w_prob"][:, 1])[None, :],
                   1, Hp, jnp.float32)
    b_diff = (params["b_prob"][0, 0] - params["b_prob"][0, 1]
              ).reshape(1, 1).astype(jnp.float32)

    grid = (Bp // TB,)
    resident = lambda shape: pl.BlockSpec(shape, lambda i: (0, 0))

    ctx_p, prob_p = pl.pallas_call(
        context_kernel,
        out_shape=(jax.ShapeDtypeStruct((Bp, Hp), jnp.float32),
                   jax.ShapeDtypeStruct((Bp, _LANE), jnp.float32)),
        grid=grid,
        in_specs=[
            pl.BlockSpec((TB, Dp), lambda i: (i, 0)),           # x (tiled on B)
            resident((Dp, Hp)), resident((1, Hp)),              # w_pos, b_pos
            resident((Dp, Hp)), resident((1, Hp)),              # w_neg, b_neg
            resident((Hp, Hp)), resident((Hp, Hp)),             # w_pre top/bot
            resident((1, Hp)),                                  # b_pre
            resident((1, Hp)),                                  # w_diff
            pl.BlockSpec(memory_space=pltpu.MemorySpace.SMEM),  # b_diff scalar
        ],
        out_specs=(pl.BlockSpec((TB, Hp), lambda i: (i, 0)),
                   pl.BlockSpec((TB, _LANE), lambda i: (i, 0))),
        compiler_params=pltpu.CompilerParams(
            dimension_semantics=("parallel",)),
    )(x_p, w_pos, b_pos, w_neg, b_neg,
      w_pre_t, w_pre_b, b_pre, w_diff, b_diff)

    return ctx_p[:B, :H], prob_p[:B, 0]


def init_params(key, input_dim, context_dim):
    ks = jax.random.split(key, 8)
    sc = 0.1
    H = context_dim
    return {
        # stored as (in, out) — i.e. PyTorch nn.Linear weight transposed
        "w_pos":  sc * jax.random.normal(ks[0], (input_dim, H), jnp.float32),
        "b_pos":  sc * jax.random.normal(ks[1], (1, H), jnp.float32),
        "w_neg":  sc * jax.random.normal(ks[2], (input_dim, H), jnp.float32),
        "b_neg":  sc * jax.random.normal(ks[3], (1, H), jnp.float32),
        "w_pre":  sc * jax.random.normal(ks[4], (2 * H, H), jnp.float32),
        "b_pre":  sc * jax.random.normal(ks[5], (1, H), jnp.float32),
        "w_prob": sc * jax.random.normal(ks[6], (H, 2), jnp.float32),
        "b_prob": sc * jax.random.normal(ks[7], (1, 2), jnp.float32),
    }


def _reference(x, p):
    silu = lambda v: v * jax.nn.sigmoid(v)
    pos = silu(x @ p["w_pos"] + p["b_pos"])
    neg = silu(x @ p["w_neg"] + p["b_neg"])
    z = silu(jnp.concatenate([pos, neg], axis=1) @ p["w_pre"] + p["b_pre"])
    logits = z @ p["w_prob"] + p["b_prob"]
    probs = jax.nn.softmax(logits, axis=1)
    ctx = probs[:, 0:1] * pos + probs[:, 1:2] * neg
    return ctx, probs[:, 0]


if __name__ == "__main__":
    key = jax.random.PRNGKey(0)
    k_x, k_p = jax.random.split(key)

    B, input_dim, context_dim = 8, 16, 32
    x = jax.random.normal(k_x, (B, input_dim), jnp.float32)
    params = init_params(k_p, input_dim, context_dim)

    ctx, prob_pos = context_forward(x, params)
    jax.block_until_ready((ctx, prob_pos))

    ctx_ref, prob_ref = _reference(x, params)
    assert ctx.shape == (B, context_dim) and prob_pos.shape == (B,)
    # bf16 matmul operands (f32 accumulation) -> loosened tolerance vs the
    # pure-f32 reference.
    assert jnp.allclose(ctx, ctx_ref, atol=2e-2, rtol=2e-2)
    assert jnp.allclose(prob_pos, prob_ref, atol=2e-2, rtol=2e-2)

    print("KERNEL_OK")
</pallas_src>

<mosaic_0001>
module attributes {stable_mosaic.version = 11 : i64} {
  func.func @context_kernel(%arg0: i32, %arg1: memref<8x128xbf16, #tpu.memory_space<vmem>>, %arg2: memref<128x128xbf16, #tpu.memory_space<vmem>>, %arg3: memref<1x128xf32, #tpu.memory_space<vmem>>, %arg4: memref<128x128xbf16, #tpu.memory_space<vmem>>, %arg5: memref<1x128xf32, #tpu.memory_space<vmem>>, %arg6: memref<128x128xbf16, #tpu.memory_space<vmem>>, %arg7: memref<128x128xbf16, #tpu.memory_space<vmem>>, %arg8: memref<1x128xf32, #tpu.memory_space<vmem>>, %arg9: memref<1x128xf32, #tpu.memory_space<vmem>>, %arg10: memref<1x1xf32, #tpu.memory_space<smem>>, %arg11: memref<8x128xf32, #tpu.memory_space<vmem>>, %arg12: memref<8x128xf32, #tpu.memory_space<vmem>>) attributes {dimension_semantics = [#tpu.dimension_semantics<parallel>], iteration_bounds = array<i64: 1>, scalar_prefetch = 0 : i64, scratch_operands = 0 : i64, tpu.core_type = #tpu.core_type<tc>, window_params = [{transform_indices = @transform_0, window_bounds = array<i64: 8, 128>}, {pipeline_mode = #tpu.pipeline_mode<synchronous>, transform_indices = @transform_1, window_bounds = array<i64: 128, 128>}, {pipeline_mode = #tpu.pipeline_mode<synchronous>, transform_indices = @transform_2, window_bounds = array<i64: 1, 128>}, {pipeline_mode = #tpu.pipeline_mode<synchronous>, transform_indices = @transform_3, window_bounds = array<i64: 128, 128>}, {pipeline_mode = #tpu.pipeline_mode<synchronous>, transform_indices = @transform_4, window_bounds = array<i64: 1, 128>}, {pipeline_mode = #tpu.pipeline_mode<synchronous>, transform_indices = @transform_5, window_bounds = array<i64: 128, 128>}, {pipeline_mode = #tpu.pipeline_mode<synchronous>, transform_indices = @transform_6, window_bounds = array<i64: 128, 128>}, {pipeline_mode = #tpu.pipeline_mode<synchronous>, transform_indices = @transform_7, window_bounds = array<i64: 1, 128>}, {pipeline_mode = #tpu.pipeline_mode<synchronous>, transform_indices = @transform_8, window_bounds = array<i64: 1, 128>}, {transform_indices = @transform_9, window_bounds = array<i64: 1, 1>}, {transform_indices = @transform_10, window_bounds = array<i64: 8, 128>}, {transform_indices = @transform_11, window_bounds = array<i64: 8, 128>}]} {
    %c0 = arith.constant 0 : index
    %c0_0 = arith.constant 0 : index
    %0 = vector.load %arg1[%c0, %c0_0] : memref<8x128xbf16, #tpu.memory_space<vmem>>, vector<8x128xbf16>
    %c0_1 = arith.constant 0 : index
    %c0_2 = arith.constant 0 : index
    %1 = vector.load %arg2[%c0_1, %c0_2] : memref<128x128xbf16, #tpu.memory_space<vmem>>, vector<128x128xbf16>
    %cst = arith.constant dense<0.000000e+00> : vector<8x128xf32>
    %2 = tpu.matmul %0, %1, %cst {dimension_numbers = #tpu.dot_dimension_numbers<[1], [0], [0], [1], [0, 0, 1, 1], [], []>} : vector<8x128xbf16>, vector<128x128xbf16>, vector<8x128xf32> -> vector<8x128xf32>
    %c0_3 = arith.constant 0 : index
    %c0_4 = arith.constant 0 : index
    %3 = vector.load %arg3[%c0_3, %c0_4] : memref<1x128xf32, #tpu.memory_space<vmem>>, vector<1x128xf32>
    %4 = vector.broadcast %3 : vector<1x128xf32> to vector<8x128xf32>
    %5 = arith.addf %2, %4 : vector<8x128xf32>
    %6 = arith.negf %5 : vector<8x128xf32>
    %7 = math.exp %6 : vector<8x128xf32>
    %cst_5 = arith.constant 1.000000e+00 : f32
    %8 = vector.broadcast %cst_5 : f32 to vector<8x128xf32>
    %9 = arith.addf %8, %7 : vector<8x128xf32>
    %10 = arith.divf %8, %9 : vector<8x128xf32>
    %11 = arith.mulf %5, %10 : vector<8x128xf32>
    %c0_6 = arith.constant 0 : index
    %c0_7 = arith.constant 0 : index
    %12 = vector.load %arg4[%c0_6, %c0_7] : memref<128x128xbf16, #tpu.memory_space<vmem>>, vector<128x128xbf16>
    %cst_8 = arith.constant dense<0.000000e+00> : vector<8x128xf32>
    %13 = tpu.matmul %0, %12, %cst_8 {dimension_numbers = #tpu.dot_dimension_numbers<[1], [0], [0], [1], [0, 0, 1, 1], [], []>} : vector<8x128xbf16>, vector<128x128xbf16>, vector<8x128xf32> -> vector<8x128xf32>
    %c0_9 = arith.constant 0 : index
    %c0_10 = arith.constant 0 : index
    %14 = vector.load %arg5[%c0_9, %c0_10] : memref<1x128xf32, #tpu.memory_space<vmem>>, vector<1x128xf32>
    %15 = vector.broadcast %14 : vector<1x128xf32> to vector<8x128xf32>
    %16 = arith.addf %13, %15 : vector<8x128xf32>
    %17 = arith.negf %16 : vector<8x128xf32>
    %18 = math.exp %17 : vector<8x128xf32>
    %cst_11 = arith.constant 1.000000e+00 : f32
    %19 = vector.broadcast %cst_11 : f32 to vector<8x128xf32>
    %20 = arith.addf %19, %18 : vector<8x128xf32>
    %21 = arith.divf %19, %20 : vector<8x128xf32>
    %22 = arith.mulf %16, %21 : vector<8x128xf32>
    %23 = arith.truncf %11 : vector<8x128xf32> to vector<8x128xbf16>
    %c0_12 = arith.constant 0 : index
    %c0_13 = arith.constant 0 : index
    %24 = vector.load %arg6[%c0_12, %c0_13] : memref<128x128xbf16, #tpu.memory_space<vmem>>, vector<128x128xbf16>
    %cst_14 = arith.constant dense<0.000000e+00> : vector<8x128xf32>
    %25 = tpu.matmul %23, %24, %cst_14 {dimension_numbers = #tpu.dot_dimension_numbers<[1], [0], [0], [1], [0, 0, 1, 1], [], []>} : vector<8x128xbf16>, vector<128x128xbf16>, vector<8x128xf32> -> vector<8x128xf32>
    %26 = arith.truncf %22 : vector<8x128xf32> to vector<8x128xbf16>
    %c0_15 = arith.constant 0 : index
    %c0_16 = arith.constant 0 : index
    %27 = vector.load %arg7[%c0_15, %c0_16] : memref<128x128xbf16, #tpu.memory_space<vmem>>, vector<128x128xbf16>
    %cst_17 = arith.constant dense<0.000000e+00> : vector<8x128xf32>
    %28 = tpu.matmul %26, %27, %cst_17 {dimension_numbers = #tpu.dot_dimension_numbers<[1], [0], [0], [1], [0, 0, 1, 1], [], []>} : vector<8x128xbf16>, vector<128x128xbf16>, vector<8x128xf32> -> vector<8x128xf32>
    %29 = arith.addf %25, %28 : vector<8x128xf32>
    %c0_18 = arith.constant 0 : index
    %c0_19 = arith.constant 0 : index
    %30 = vector.load %arg8[%c0_18, %c0_19] : memref<1x128xf32, #tpu.memory_space<vmem>>, vector<1x128xf32>
    %31 = vector.broadcast %30 : vector<1x128xf32> to vector<8x128xf32>
    %32 = arith.addf %29, %31 : vector<8x128xf32>
    %33 = arith.negf %32 : vector<8x128xf32>
    %34 = math.exp %33 : vector<8x128xf32>
    %cst_20 = arith.constant 1.000000e+00 : f32
    %35 = vector.broadcast %cst_20 : f32 to vector<8x128xf32>
    %36 = arith.addf %35, %34 : vector<8x128xf32>
    %37 = arith.divf %35, %36 : vector<8x128xf32>
    %38 = arith.mulf %32, %37 : vector<8x128xf32>
    %c0_21 = arith.constant 0 : index
    %c0_22 = arith.constant 0 : index
    %39 = vector.load %arg9[%c0_21, %c0_22] : memref<1x128xf32, #tpu.memory_space<vmem>>, vector<1x128xf32>
    %40 = vector.broadcast %39 : vector<1x128xf32> to vector<8x128xf32>
    %41 = arith.mulf %38, %40 : vector<8x128xf32>
    %cst_23 = arith.constant dense<0.000000e+00> : vector<8xf32>
    %42 = vector.multi_reduction <add>, %41, %cst_23 [1] : vector<8x128xf32> to vector<8xf32>
    %43 = vector.shape_cast %42 : vector<8xf32> to vector<8x1xf32>
    %c0_24 = arith.constant 0 : index
    %c0_25 = arith.constant 0 : index
    %44 = memref.load %arg10[%c0_24, %c0_25] : memref<1x1xf32, #tpu.memory_space<smem>>
    %45 = vector.broadcast %44 : f32 to vector<8x1xf32>
    %46 = arith.addf %43, %45 : vector<8x1xf32>
    %47 = arith.negf %46 : vector<8x1xf32>
    %48 = math.exp %47 : vector<8x1xf32>
    %cst_26 = arith.constant 1.000000e+00 : f32
    %49 = vector.broadcast %cst_26 : f32 to vector<8x1xf32>
    %50 = arith.addf %49, %48 : vector<8x1xf32>
    %51 = arith.divf %49, %50 : vector<8x1xf32>
    %cst_27 = arith.constant 1.000000e+00 : f32
    %52 = vector.broadcast %cst_27 : f32 to vector<8x1xf32>
    %53 = arith.subf %52, %51 : vector<8x1xf32>
    %54 = vector.broadcast %51 : vector<8x1xf32> to vector<8x128xf32>
    %55 = arith.mulf %54, %11 : vector<8x128xf32>
    %56 = vector.broadcast %53 : vector<8x1xf32> to vector<8x128xf32>
    %57 = arith.mulf %56, %22 : vector<8x128xf32>
    %58 = arith.addf %55, %57 : vector<8x128xf32>
    %c0_28 = arith.constant 0 : index
    %c0_29 = arith.constant 0 : index
    %59 = vector.load %arg11[%c0_28, %c0_29] : memref<8x128xf32, #tpu.memory_space<vmem>>, vector<8x128xf32>
    tpu.vector_store %arg11[%c0_28, %c0_29], %58 {strides = array<i32>} : memref<8x128xf32, #tpu.memory_space<vmem>>, vector<8x128xf32>,
    %60 = vector.shape_cast %51 : vector<8x1xf32> to vector<8x1xf32>
    %61 = vector.broadcast %60 : vector<8x1xf32> to vector<8x128xf32>
    %c0_30 = arith.constant 0 : index
    %c0_31 = arith.constant 0 : index
    %62 = vector.load %arg12[%c0_30, %c0_31] : memref<8x128xf32, #tpu.memory_space<vmem>>, vector<8x128xf32>
    tpu.vector_store %arg12[%c0_30, %c0_31], %61 {strides = array<i32>} : memref<8x128xf32, #tpu.memory_space<vmem>>, vector<8x128xf32>,
    return
  }
  func.func @transform_0(%arg0: i32) -> (i32, i32) {
    %c0_i32 = arith.constant 0 : i32
    %c0_i32_0 = arith.constant 0 : i32
    return %arg0, %c0_i32 : i32, i32
  }
  func.func @transform_1(%arg0: i32) -> (i32, i32) {
    %c0_i32 = arith.constant 0 : i32
    %c0_i32_0 = arith.constant 0 : i32
    %c0_i32_1 = arith.constant 0 : i32
    return %c0_i32, %c0_i32_0 : i32, i32
  }
  func.func @transform_2(%arg0: i32) -> (i32, i32) {
    %c0_i32 = arith.constant 0 : i32
    %c0_i32_0 = arith.constant 0 : i32
    %c0_i32_1 = arith.constant 0 : i32
    return %c0_i32, %c0_i32_0 : i32, i32
  }
  func.func @transform_3(%arg0: i32) -> (i32, i32) {
    %c0_i32 = arith.constant 0 : i32
    %c0_i32_0 = arith.constant 0 : i32
    %c0_i32_1 = arith.constant 0 : i32
    return %c0_i32, %c0_i32_0 : i32, i32
  }
  func.func @transform_4(%arg0: i32) -> (i32, i32) {
    %c0_i32 = arith.constant 0 : i32
    %c0_i32_0 = arith.constant 0 : i32
    %c0_i32_1 = arith.constant 0 : i32
    return %c0_i32, %c0_i32_0 : i32, i32
  }
  func.func @transform_5(%arg0: i32) -> (i32, i32) {
    %c0_i32 = arith.constant 0 : i32
    %c0_i32_0 = arith.constant 0 : i32
    %c0_i32_1 = arith.constant 0 : i32
    return %c0_i32, %c0_i32_0 : i32, i32
  }
  func.func @transform_6(%arg0: i32) -> (i32, i32) {
    %c0_i32 = arith.constant 0 : i32
    %c0_i32_0 = arith.constant 0 : i32
    %c0_i32_1 = arith.constant 0 : i32
    return %c0_i32, %c0_i32_0 : i32, i32
  }
  func.func @transform_7(%arg0: i32) -> (i32, i32) {
    %c0_i32 = arith.constant 0 : i32
    %c0_i32_0 = arith.constant 0 : i32
    %c0_i32_1 = arith.constant 0 : i32
    return %c0_i32, %c0_i32_0 : i32, i32
  }
  func.func @transform_8(%arg0: i32) -> (i32, i32) {
    %c0_i32 = arith.constant 0 : i32
    %c0_i32_0 = arith.constant 0 : i32
    %c0_i32_1 = arith.constant 0 : i32
    return %c0_i32, %c0_i32_0 : i32, i32
  }
  func.func @transform_9(%arg0: i32) -> (i32, i32) {
    %c0_i32 = arith.constant 0 : i32
    %c0_i32_0 = arith.constant 0 : i32
    %c0_i32_1 = arith.constant 0 : i32
    return %c0_i32, %c0_i32_0 : i32, i32
  }
  func.func @transform_10(%arg0: i32) -> (i32, i32) {
    %c0_i32 = arith.constant 0 : i32
    %c0_i32_0 = arith.constant 0 : i32
    return %arg0, %c0_i32 : i32, i32
  }
  func.func @transform_11(%arg0: i32) -> (i32, i32) {
    %c0_i32 = arith.constant 0 : i32
    %c0_i32_0 = arith.constant 0 : i32
    return %arg0, %c0_i32 : i32, i32
  }
}

</mosaic_0001>

<llo_original>
// kernel: context_forward.1
$region0: #{context_forward.1}
  #allocation0 [shape = 'u32[]', space=smem, size = 0x4, offset = 0x4, fixed_abs, tag = 'smem constant byte address 0x4 - core index']
  #allocation1 [shape = 'u32[72,128]{1,0:T(1,128)}', space=vmem, size = 0x9000, scoped, tag = 'internal scratch']
  #allocation2 [shape = 'f32[1,1]{1,0:T(1,128)S(6)}', space=smem, size = 0x200, scoped, tag = 'scoped memory for context_forward.1']
  %s0 = inlined_call_operand.vmem [shape: bf16[8,128], index: 0, kind: input, shape index: {}]
  %s1 = inlined_call_operand.vmem [shape: bf16[128,128], index: 1, kind: input, shape index: {}]
  %s2 = inlined_call_operand.vmem [shape: f32[1,128], index: 2, kind: input, shape index: {}]
  %s3 = inlined_call_operand.vmem [shape: bf16[128,128], index: 3, kind: input, shape index: {}]
  %s4 = inlined_call_operand.vmem [shape: f32[1,128], index: 4, kind: input, shape index: {}]
  %s5 = inlined_call_operand.vmem [shape: bf16[128,128], index: 5, kind: input, shape index: {}]
  %s6 = inlined_call_operand.vmem [shape: bf16[128,128], index: 6, kind: input, shape index: {}]
  %s7 = inlined_call_operand.vmem [shape: f32[1,128], index: 7, kind: input, shape index: {}]
  %s8 = inlined_call_operand.vmem [shape: f32[1,128], index: 8, kind: input, shape index: {}]
  %s9 = inlined_call_operand.<no memory space> [shape: f32[1,1], index: 9, kind: input, shape index: {}]
  %s10 = inlined_call_operand.hbm [shape: f32[8,128], index: 10, kind: output, shape index: {0}]
  %s11 = inlined_call_operand.vmem [shape: f32[8,128], index: 11, kind: output, shape index: {1}]
  %12 = xla_tuple %s10, %s11
  %s13 = sld [smem:[#allocation0]]
  $region58: #{context_forward.1} parent=0
    _
  %s15 = ssub.s32 1, %s13
  %s16 = scalar_select 0, %s15, %s13
  %17 = sst [smem:[#allocation2]] %s9
  $region1: #{context_forward.1} parent=0
    #allocation3 [shape = 'u8[4096]{0}', space=vmem, size = 0x1000, scoped, tag = 'output window, operand 0, single buffered']
    #allocation4 [shape = 's32[1]{0}', space=sflag, size = 0x4, scoped, tag = 'scoped memory for context_forward.1']
    %18 = vsyncpa [#allocation4], 0
    // Predicated region
    $region2: #{context_forward.1} parent=1 // pred_check
      _
    $region3: #{context_forward.1} parent=1 // pred_check_branch
      %20 = sbr.rel (0) target = $region5
    $region4: #{context_forward.1} parent=1 // pred_region
      _
    $region5: #{context_forward.1} parent=1 // pred_fallthru
      _
    // Predicated region
    $region6: #{context_forward.1} parent=1 // pred_check
      _
    $region7: #{context_forward.1} parent=1 // pred_check_branch
      %22 = sbr.rel (0) target = $region9
    $region8: #{context_forward.1} parent=1 // pred_region
      _
    $region9: #{context_forward.1} parent=1 // pred_fallthru
      _
    // Predicated region
    $region10: #{context_forward.1} parent=1 // pred_check
      _
    $region11: #{context_forward.1} parent=1 // pred_check_branch
      %24 = sbr.rel (0) target = $region13
    $region12: #{context_forward.1} parent=1 // pred_region
      _
    $region13: #{context_forward.1} parent=1 // pred_fallthru
      _
    // Predicated region
    $region14: #{context_forward.1} parent=1 // pred_check
      _
    $region15: #{context_forward.1} parent=1 // pred_check_branch
      %26 = sbr.rel (0) target = $region17
    $region16: #{context_forward.1} parent=1 // pred_region
      _
    $region17: #{context_forward.1} parent=1 // pred_fallthru
      _
    // Predicated region
    $region18: #{context_forward.1} parent=1 // pred_check
      _
    $region19: #{context_forward.1} parent=1 // pred_check_branch
      %28 = sbr.rel (0) target = $region21
    $region20: #{context_forward.1} parent=1 // pred_region
      _
    $region21: #{context_forward.1} parent=1 // pred_fallthru
      _
    // Predicated region
    $region22: #{context_forward.1} parent=1 // pred_check
      _
    $region23: #{context_forward.1} parent=1 // pred_check_branch
      %30 = sbr.rel (0) target = $region25
    $region24: #{context_forward.1} parent=1 // pred_region
      _
    $region25: #{context_forward.1} parent=1 // pred_fallthru
      _
    // Predicated region
    $region26: #{context_forward.1} parent=1 // pred_check
      _
    $region27: #{context_forward.1} parent=1 // pred_check_branch
      %32 = sbr.rel (0) target = $region29
    $region28: #{context_forward.1} parent=1 // pred_region
      _
    $region29: #{context_forward.1} parent=1 // pred_fallthru
      _
    // Predicated region
    $region30: #{context_forward.1} parent=1 // pred_check
      _
    $region31: #{context_forward.1} parent=1 // pred_check_branch
      %34 = sbr.rel (0) target = $region33
    $region32: #{context_forward.1} parent=1 // pred_region
      _
    $region33: #{context_forward.1} parent=1 // pred_fallthru
      _
    // Predicated region
    $region34: #{context_forward.1} parent=1 // pred_check
      _
    $region35: #{context_forward.1} parent=1 // pred_check_branch
      %36 = sbr.rel (0) target = $region37
    $region36: #{context_forward.1} parent=1 // pred_region
      _
    $region37: #{context_forward.1} parent=1 // pred_fallthru
      _
    // Predicated region
    $region38: #{context_forward.1} parent=1 // pred_check
      _
    $region39: #{context_forward.1} parent=1 // pred_check_branch
      %38 = sbr.rel (0) target = $region41
    $region40: #{context_forward.1} parent=1 // pred_region
      _
    $region41: #{context_forward.1} parent=1 // pred_fallthru
      _
    %v39 = vld [vmem:[%s0] sm:$0xf]
    %v40 = vld [vmem:[%s1] sm:$0xf]
    %v41 = vld [vmem:[%s1 + $0x4] sm:$0xf]
    %v42 = vld [vmem:[%s1 + $0x8] sm:$0xf]
    %v43 = vld [vmem:[%s1 + $0xc] sm:$0xf]
    %v44 = vld [vmem:[%s1 + $0x10] sm:$0xf]
    %v45 = vld [vmem:[%s1 + $0x14] sm:$0xf]
    %v46 = vld [vmem:[%s1 + $0x18] sm:$0xf]
    %v47 = vld [vmem:[%s1 + $0x1c] sm:$0xf]
    %v48 = vld [vmem:[%s1 + $0x20] sm:$0xf]
    %v49 = vld [vmem:[%s1 + $0x24] sm:$0xf]
    %v50 = vld [vmem:[%s1 + $0x28] sm:$0xf]
    %v51 = vld [vmem:[%s1 + $0x2c] sm:$0xf]
    %v52 = vld [vmem:[%s1 + $0x30] sm:$0xf]
    %v53 = vld [vmem:[%s1 + $0x34] sm:$0xf]
    %v54 = vld [vmem:[%s1 + $0x38] sm:$0xf]
    %v55 = vld [vmem:[%s1 + $0x3c] sm:$0xf]
    %v56 = vld [vmem:[%s2] sm:$0x1]
    %v58 = vperm.slane %v56, 0
    %v76 = vunpack.c.l.b16 %v40
    %v77 = vunpack.c.l.b16 %v41
    %v78 = vunpack.c.l.b16 %v42
    %v79 = vunpack.c.l.b16 %v43
    %v80 = vunpack.c.l.b16 %v44
    %v81 = vunpack.c.l.b16 %v45
    %v82 = vunpack.c.l.b16 %v46
    %v83 = vunpack.c.l.b16 %v47
    %v84 = vunpack.c.l.b16 %v48
    %v85 = vunpack.c.l.b16 %v49
    %v86 = vunpack.c.l.b16 %v50
    %v87 = vunpack.c.l.b16 %v51
    %v88 = vunpack.c.l.b16 %v52
    %v89 = vunpack.c.l.b16 %v53
    %v90 = vunpack.c.l.b16 %v54
    %v91 = vunpack.c.l.b16 %v55
    %v92 = vpack.c.b16 %v77, %v76
    %v93 = vpack.c.b16 %v79, %v78
    %v94 = vpack.c.b16 %v81, %v80
    %v95 = vpack.c.b16 %v83, %v82
    %v96 = vpack.c.b16 %v85, %v84
    %v97 = vpack.c.b16 %v87, %v86
    %v98 = vpack.c.b16 %v89, %v88
    %v99 = vpack.c.b16 %v91, %v90
    %108 = vmatpush.bf16.msra.mxu0 %v99
    %109 = vmatpush.bf16.msra.mxu0 %v98
    %110 = vmatpush.bf16.msra.mxu0 %v97
    %111 = vmatpush.bf16.msra.mxu0 %v96
    %112 = vmatpush.bf16.msra.mxu0 %v95
    %113 = vmatpush.bf16.msra.mxu0 %v94
    %114 = vmatpush.bf16.msra.mxu0 %v93
    %115 = vmatpush.bf16.msra.mxu0 %v92
    %116 = vmatmul.bf16.gmra.mxu0 %v39
    %v117 = vpop.f32.mrf.mxu0
    %v118 = vadd.f32 %v58, %v117
    %v119 = vpop.f32.mrf.mxu0
    %120 = vdwg.mxu0
    %v121 = vxor.u32 %v118, 2147483648
    %v122 = vmul.f32 %v121, 1.442695
    %v123 = vpow.pop %v122
    %v124 = vadd.f32 %v123, 1.0
    %v125 = vrcp.pop %v124
    %v126 = vmul.f32 %v124, %v125
    %v127 = vsub.f32 1.0, %v126
    %v128 = vmul.f32 %v125, %v127
    %v129 = vadd.f32 %v125, %v128
    %vm130 = vweird.f32 %v124
    %vm131 = vweird.f32 %v125
    %vm132 = vmor %vm130, %vm131
    %v133 = vsel %vm132, %v125, %v129
    %v134 = vand.u32 2147483647, %v124
    %vm135 = vcmp.eq.f32.partialorder %v134, 8.507059e+37
    %v136 = vand.u32 %v124, 2147483648
    %v137 = vor.u32 1.1754944e-38, %v136
    %v138 = vsel %vm135, %v137, %v133
    %v139 = vmul.f32 1.0, %v138
    %v140 = vmul.f32 %v118, %v139
    %v141 = vld [vmem:[%s3] sm:$0xf]
    %v142 = vld [vmem:[%s3 + $0x4] sm:$0xf]
    %v143 = vld [vmem:[%s3 + $0x8] sm:$0xf]
    %v144 = vld [vmem:[%s3 + $0xc] sm:$0xf]
    %v145 = vld [vmem:[%s3 + $0x10] sm:$0xf]
    %v146 = vld [vmem:[%s3 + $0x14] sm:$0xf]
    %v147 = vld [vmem:[%s3 + $0x18] sm:$0xf]
    %v148 = vld [vmem:[%s3 + $0x1c] sm:$0xf]
    %v149 = vld [vmem:[%s3 + $0x20] sm:$0xf]
    %v150 = vld [vmem:[%s3 + $0x24] sm:$0xf]
    %v151 = vld [vmem:[%s3 + $0x28] sm:$0xf]
    %v152 = vld [vmem:[%s3 + $0x2c] sm:$0xf]
    %v153 = vld [vmem:[%s3 + $0x30] sm:$0xf]
    %v154 = vld [vmem:[%s3 + $0x34] sm:$0xf]
    %v155 = vld [vmem:[%s3 + $0x38] sm:$0xf]
    %v156 = vld [vmem:[%s3 + $0x3c] sm:$0xf]
    %v157 = vld [vmem:[%s4] sm:$0x1]
    %v159 = vperm.slane %v157, 0
    %v177 = vunpack.c.l.b16 %v141
    %v178 = vunpack.c.l.b16 %v142
    %v179 = vunpack.c.l.b16 %v143
    %v180 = vunpack.c.l.b16 %v144
    %v181 = vunpack.c.l.b16 %v145
    %v182 = vunpack.c.l.b16 %v146
    %v183 = vunpack.c.l.b16 %v147
    %v184 = vunpack.c.l.b16 %v148
    %v185 = vunpack.c.l.b16 %v149
    %v186 = vunpack.c.l.b16 %v150
    %v187 = vunpack.c.l.b16 %v151
    %v188 = vunpack.c.l.b16 %v152
    %v189 = vunpack.c.l.b16 %v153
    %v190 = vunpack.c.l.b16 %v154
    %v191 = vunpack.c.l.b16 %v155
    %v192 = vunpack.c.l.b16 %v156
    %v193 = vpack.c.b16 %v178, %v177
    %v194 = vpack.c.b16 %v180, %v179
    %v195 = vpack.c.b16 %v182, %v181
    %v196 = vpack.c.b16 %v184, %v183
    %v197 = vpack.c.b16 %v186, %v185
    %v198 = vpack.c.b16 %v188, %v187
    %v199 = vpack.c.b16 %v190, %v189
    %v200 = vpack.c.b16 %v192, %v191
    %209 = vmatpush.bf16.msra.mxu0 %v200
    %210 = vmatpush.bf16.msra.mxu0 %v199
    %211 = vmatpush.bf16.msra.mxu0 %v198
    %212 = vmatpush.bf16.msra.mxu0 %v197
    %213 = vmatpush.bf16.msra.mxu0 %v196
    %214 = vmatpush.bf16.msra.mxu0 %v195
    %215 = vmatpush.bf16.msra.mxu0 %v194
    %216 = vmatpush.bf16.msra.mxu0 %v193
    %217 = vmatmul.bf16.gmra.mxu0 %v39
    %v218 = vpop.f32.mrf.mxu0
    %v219 = vadd.f32 %v159, %v218
    %v220 = vpop.f32.mrf.mxu0
    %221 = vdwg.mxu0
    %v222 = vxor.u32 %v219, 2147483648
    %v223 = vmul.f32 %v222, 1.442695
    %v224 = vpow.pop %v223
    %v225 = vadd.f32 %v224, 1.0
    %v226 = vrcp.pop %v225
    %v227 = vmul.f32 %v225, %v226
    %v228 = vsub.f32 1.0, %v227
    %v229 = vmul.f32 %v226, %v228
    %v230 = vadd.f32 %v226, %v229
    %vm231 = vweird.f32 %v225
    %vm232 = vweird.f32 %v226
    %vm233 = vmor %vm231, %vm232
    %v234 = vsel %vm233, %v226, %v230
    %v235 = vand.u32 2147483647, %v225
    %vm236 = vcmp.eq.f32.partialorder %v235, 8.507059e+37
    %v237 = vand.u32 %v225, 2147483648
    %v238 = vor.u32 1.1754944e-38, %v237
    %v239 = vsel %vm236, %v238, %v234
    %v240 = vmul.f32 1.0, %v239
    %v241 = vmul.f32 %v219, %v240
    %v242 = vpack.c.bf16 %v140, %v140
    %v243 = vld [vmem:[%s5] sm:$0xf]
    %v244 = vld [vmem:[%s5 + $0x4] sm:$0xf]
    %v245 = vld [vmem:[%s5 + $0x8] sm:$0xf]
    %v246 = vld [vmem:[%s5 + $0xc] sm:$0xf]
    %v247 = vld [vmem:[%s5 + $0x10] sm:$0xf]
    %v248 = vld [vmem:[%s5 + $0x14] sm:$0xf]
    %v249 = vld [vmem:[%s5 + $0x18] sm:$0xf]
    %v250 = vld [vmem:[%s5 + $0x1c] sm:$0xf]
    %v251 = vld [vmem:[%s5 + $0x20] sm:$0xf]
    %v252 = vld [vmem:[%s5 + $0x24] sm:$0xf]
    %v253 = vld [vmem:[%s5 + $0x28] sm:$0xf]
    %v254 = vld [vmem:[%s5 + $0x2c] sm:$0xf]
    %v255 = vld [vmem:[%s5 + $0x30] sm:$0xf]
    %v256 = vld [vmem:[%s5 + $0x34] sm:$0xf]
    %v257 = vld [vmem:[%s5 + $0x38] sm:$0xf]
    %v258 = vld [vmem:[%s5 + $0x3c] sm:$0xf]
    %v259 = vpack.c.bf16 %v241, %v241
    %v260 = vld [vmem:[%s6] sm:$0xf]
    %v261 = vld [vmem:[%s6 + $0x4] sm:$0xf]
    %v262 = vld [vmem:[%s6 + $0x8] sm:$0xf]
    %v263 = vld [vmem:[%s6 + $0xc] sm:$0xf]
    %v264 = vld [vmem:[%s6 + $0x10] sm:$0xf]
    %v265 = vld [vmem:[%s6 + $0x14] sm:$0xf]
    %v266 = vld [vmem:[%s6 + $0x18] sm:$0xf]
    %v267 = vld [vmem:[%s6 + $0x1c] sm:$0xf]
    %v268 = vld [vmem:[%s6 + $0x20] sm:$0xf]
    %v269 = vld [vmem:[%s6 + $0x24] sm:$0xf]
    %v270 = vld [vmem:[%s6 + $0x28] sm:$0xf]
    %v271 = vld [vmem:[%s6 + $0x2c] sm:$0xf]
    %v272 = vld [vmem:[%s6 + $0x30] sm:$0xf]
    %v273 = vld [vmem:[%s6 + $0x34] sm:$0xf]
    %v274 = vld [vmem:[%s6 + $0x38] sm:$0xf]
    %v275 = vld [vmem:[%s6 + $0x3c] sm:$0xf]
    %v292 = vunpack.c.l.b16 %v260
    %v293 = vunpack.c.l.b16 %v261
    %v294 = vunpack.c.l.b16 %v262
    %v295 = vunpack.c.l.b16 %v263
    %v296 = vunpack.c.l.b16 %v264
    %v297 = vunpack.c.l.b16 %v265
    %v298 = vunpack.c.l.b16 %v266
    %v299 = vunpack.c.l.b16 %v267
    %v300 = vunpack.c.l.b16 %v268
    %v301 = vunpack.c.l.b16 %v269
    %v302 = vunpack.c.l.b16 %v270
    %v303 = vunpack.c.l.b16 %v271
    %v304 = vunpack.c.l.b16 %v272
    %v305 = vunpack.c.l.b16 %v273
    %v306 = vunpack.c.l.b16 %v274
    %v307 = vunpack.c.l.b16 %v275
    %v308 = vpack.c.b16 %v293, %v292
    %v309 = vpack.c.b16 %v295, %v294
    %v310 = vpack.c.b16 %v297, %v296
    %v311 = vpack.c.b16 %v299, %v298
    %v312 = vpack.c.b16 %v301, %v300
    %v313 = vpack.c.b16 %v303, %v302
    %v314 = vpack.c.b16 %v305, %v304
    %v315 = vpack.c.b16 %v307, %v306
    %324 = vmatpush.bf16.msra.mxu0 %v315
    %325 = vmatpush.bf16.msra.mxu0 %v314
    %326 = vmatpush.bf16.msra.mxu0 %v313
    %327 = vmatpush.bf16.msra.mxu0 %v312
    %328 = vmatpush.bf16.msra.mxu0 %v311
    %329 = vmatpush.bf16.msra.mxu0 %v310
    %330 = vmatpush.bf16.msra.mxu0 %v309
    %331 = vmatpush.bf16.msra.mxu0 %v308
    %332 = vmatmul.bf16.gmra.mxu0 %v259
    %v333 = vpop.f32.mrf.mxu0
    %v334 = vadd.f32 0.0, %v333
    %v335 = vpop.f32.mrf.mxu0
    %336 = vdwg.mxu0
    %v353 = vunpack.c.l.b16 %v243
    %v354 = vunpack.c.l.b16 %v244
    %v355 = vunpack.c.l.b16 %v245
    %v356 = vunpack.c.l.b16 %v246
    %v357 = vunpack.c.l.b16 %v247
    %v358 = vunpack.c.l.b16 %v248
    %v359 = vunpack.c.l.b16 %v249
    %v360 = vunpack.c.l.b16 %v250
    %v361 = vunpack.c.l.b16 %v251
    %v362 = vunpack.c.l.b16 %v252
    %v363 = vunpack.c.l.b16 %v253
    %v364 = vunpack.c.l.b16 %v254
    %v365 = vunpack.c.l.b16 %v255
    %v366 = vunpack.c.l.b16 %v256
    %v367 = vunpack.c.l.b16 %v257
    %v368 = vunpack.c.l.b16 %v258
    %v369 = vpack.c.b16 %v354, %v353
    %v370 = vpack.c.b16 %v356, %v355
    %v371 = vpack.c.b16 %v358, %v357
    %v372 = vpack.c.b16 %v360, %v359
    %v373 = vpack.c.b16 %v362, %v361
    %v374 = vpack.c.b16 %v364, %v363
    %v375 = vpack.c.b16 %v366, %v365
    %v376 = vpack.c.b16 %v368, %v367
    %385 = vmatpush.bf16.msra.mxu0 %v376
    %386 = vmatpush.bf16.msra.mxu0 %v375
    %387 = vmatpush.bf16.msra.mxu0 %v374
    %388 = vmatpush.bf16.msra.mxu0 %v373
    %389 = vmatpush.bf16.msra.mxu0 %v372
    %390 = vmatpush.bf16.msra.mxu0 %v371
    %391 = vmatpush.bf16.msra.mxu0 %v370
    %392 = vmatpush.bf16.msra.mxu0 %v369
    %393 = vmatmul.bf16.gmra.mxu0 %v242
    %v394 = vpop.f32.mrf.mxu0
    %v395 = vadd.f32 %v334, %v394
    %v396 = vpop.f32.mrf.mxu0
    %397 = vdwg.mxu0
    %v398 = vld [vmem:[%s7] sm:$0x1]
    %v400 = vperm.slane %v398, 0
    %v402 = vadd.f32 %v395, %v400
    %v403 = vxor.u32 %v402, 2147483648
    %v404 = vmul.f32 %v403, 1.442695
    %v405 = vpow.pop %v404
    %v406 = vadd.f32 %v405, 1.0
    %v407 = vrcp.pop %v406
    %v408 = vmul.f32 %v406, %v407
    %v409 = vsub.f32 1.0, %v408
    %v410 = vmul.f32 %v407, %v409
    %v411 = vadd.f32 %v407, %v410
    %vm412 = vweird.f32 %v406
    %vm413 = vweird.f32 %v407
    %vm414 = vmor %vm412, %vm413
    %v415 = vsel %vm414, %v407, %v411
    %v416 = vand.u32 2147483647, %v406
    %vm417 = vcmp.eq.f32.partialorder %v416, 8.507059e+37
    %v418 = vand.u32 %v406, 2147483648
    %v419 = vor.u32 1.1754944e-38, %v418
    %v420 = vsel %vm417, %v419, %v415
    %v421 = vmul.f32 1.0, %v420
    %v422 = vmul.f32 %v402, %v421
    %v423 = vld [vmem:[%s8] sm:$0x1]
    %v425 = vperm.slane %v423, 0
    %v427 = vmul.f32 %v422, %v425
    %428 = vadd.xlane.f32.xlu0 %v427
    %v429 = vpop.xlane.xlu0 %428
    %s430 = sld [smem:[#allocation2]]
    %v431 = vstv %s430
    %v432 = vadd.f32 %v429, %v431
    %v433 = vxor.u32 %v432, 2147483648
    %v434 = vmul.f32 %v433, 1.442695
    %v435 = vpow.pop %v434
    %v436 = vadd.f32 %v435, 1.0
    %v437 = vrcp.pop %v436
    %v438 = vmul.f32 %v436, %v437
    %v439 = vsub.f32 1.0, %v438
    %v440 = vmul.f32 %v437, %v439
    %v441 = vadd.f32 %v437, %v440
    %vm442 = vweird.f32 %v436
    %vm443 = vweird.f32 %v437
    %vm444 = vmor %vm442, %vm443
    %v445 = vsel %vm444, %v437, %v441
    %v446 = vand.u32 2147483647, %v436
    %vm447 = vcmp.eq.f32.partialorder %v446, 8.507059e+37
    %v448 = vand.u32 %v436, 2147483648
    %v449 = vor.u32 1.1754944e-38, %v448
    %v450 = vsel %vm447, %v449, %v445
    %v451 = vmul.f32 1.0, %v450
    %v452 = vsub.f32 1.0, %v451
    %v453 = vmul.f32 %v451, %v140
    %v454 = vmul.f32 %v452, %v241
    %v455 = vadd.f32 %v453, %v454
    %456 = vst [vmem:[#allocation3] sm:$0xff] %v455
    %457 = vst [vmem:[%s11] sm:$0xff] %v451
    // Predicated region
    $region42: #{context_forward.1} parent=1 // pred_check
      _
    $region43: #{context_forward.1} parent=1 // pred_check_branch
      %459 = sbr.rel (0) target = $region45
    $region44: #{context_forward.1} parent=1 // pred_region
      %461 = vsyncadd [#allocation4], 0
      %s463 = sshll.u32 [#allocation3], 4
      %s464 = int_to_ptr.vmem [resolvable:$true] %s463
      %s465 = sshll.u32 %s10, 4
      %s466 = int_to_ptr.hbm [resolvable:$true] %s465
      %468 = dma.vmem_to_hbm [thread:$0]  %s464, 128, %s466, [#allocation4]
    $region45: #{context_forward.1} parent=1 // pred_fallthru
      _
    // Predicated region
    $region46: #{context_forward.1} parent=1 // pred_check
      _
    $region47: #{context_forward.1} parent=1 // pred_check_branch
      %470 = sbr.rel (0) target = $region49
    $region48: #{context_forward.1} parent=1 // pred_region
      _
    $region49: #{context_forward.1} parent=1 // pred_fallthru
      _
    // Predicated region
    $region50: #{context_forward.1} parent=1 // pred_check
      _
    $region51: #{context_forward.1} parent=1 // pred_check_branch
      %472 = sbr.rel (0) target = $region53
    $region52: #{context_forward.1} parent=1 // pred_region
      %474 = dma.done [#allocation4], 128
    $region53: #{context_forward.1} parent=1 // pred_fallthru
      _
    // Predicated region
    $region54: #{context_forward.1} parent=1 // pred_check
      _
    $region55: #{context_forward.1} parent=1 // pred_check_branch
      %476 = sbr.rel (0) target = $region57
    $region56: #{context_forward.1} parent=1 // pred_region
      _
    $region57: #{context_forward.1} parent=1 // pred_fallthru
      _
    %477 = vsyncpa [#allocation4], 1

</llo_original>
